<compile_context>
chip_gen: v7x
topology: tpu7x:2x2x1
jax: 0.10.0
libtpu: 0.0.40
codegen_flags: <defaults>
</compile_context>

<pallas_src>
import functools

import jax
import jax.numpy as jnp
from jax.experimental import pallas as pl
from jax.experimental.pallas import tpu as pltpu

LANE = 128          # pad feature dims (D, A) to multiples of the lane width
BF16_SUBLANE = 16   # bf16 native sublane tile is (16, 128): 2 rows per sublane
MAX_TILE_M = 128    # v5e-native MXU tile; v6e/v7x could use 256 but 128 is fine


def _round_up(n, m):
    return ((n + m - 1) // m) * m


def _policy_kernel(x_ref, w1t_ref, w2t_ref, o_ref):
    # x_ref:   (tile_M, Dp) bf16   zero-padded state rows
    # w1t_ref: (Dp, Dp)     bf16   fc1 weight, (in, out) layout, zero-padded
    # w2t_ref: (Dp, Ap)     bf16   fc2 weight, (in, out) layout, zero-padded
    # o_ref:   (tile_M, Ap) f32    action logits (first A cols live)
    h = jnp.dot(x_ref[...], w1t_ref[...], preferred_element_type=jnp.float32)
    h = jnp.maximum(h, 0.0)  # ReLU in f32 (v5e VPU has no bf16 ALU path)
    o_ref[...] = jnp.dot(
        h.astype(jnp.bfloat16), w2t_ref[...], preferred_element_type=jnp.float32
    )


def prepare_policy_params(w_fc1, w_fc2, compute_dtype=jnp.bfloat16):
    """One-time parameter prep (hoisted out of the per-step hot path).

    Transposes PyTorch (out, in) weights to (in, out), zero-pads every feature
    dimension up to a multiple of 128, and casts to the MXU compute dtype.
    Cache the returned arrays across calls.
    """
    d = w_fc1.shape[0]
    a = w_fc2.shape[0]
    assert w_fc1.shape == (d, d)
    assert w_fc2.shape == (a, d)
    dp = _round_up(d, LANE)
    ap = _round_up(a, LANE)
    w1t = (
        jnp.zeros((dp, dp), compute_dtype)
        .at[:d, :d]
        .set(jnp.transpose(w_fc1).astype(compute_dtype))
    )
    w2t = (
        jnp.zeros((dp, ap), compute_dtype)
        .at[:d, :a]
        .set(jnp.transpose(w_fc2).astype(compute_dtype))
    )
    return w1t, w2t, d, a


@functools.partial(jax.jit, static_argnames=("a",))
def policy_forward_batch(x, w1t, w2t, *, a):
    """Batched Policy.forward.

    x       : (B, D) f32 — B stacked state vectors (cat(Ht, pt, Rt) per row)
    w1t,w2t : pre-transposed / padded / bf16 weights from prepare_policy_params
    a       : true action_dim (static)
    returns : (B, a) f32 action logits
    """
    b, d = x.shape
    dp = w1t.shape[0]
    ap = w2t.shape[1]
    assert dp >= d

    # Tile the M (batch) dim; bf16 rows pack 2/sublane so round to 16 minimum.
    tile_m = min(MAX_TILE_M, _round_up(b, BF16_SUBLANE))
    b_pad = _round_up(b, tile_m)
    grid_m = b_pad // tile_m

    # Zero-padded, lane-dense LHS slab. Padding is sound: zero rows stay zero
    # through relu, and zero feature cols hit zero weight rows.
    x_pad = jnp.zeros((b_pad, dp), w1t.dtype).at[:b, :d].set(x.astype(w1t.dtype))

    out = pl.pallas_call(
        _policy_kernel,
        out_shape=jax.ShapeDtypeStruct((b_pad, ap), jnp.float32),
        grid=(grid_m,),
        in_specs=[
            pl.BlockSpec((tile_m, dp), lambda i: (i, 0)),   # stream LHS tiles
            pl.BlockSpec((dp, dp), lambda i: (0, 0)),       # W1 stays resident
            pl.BlockSpec((dp, ap), lambda i: (0, 0)),       # W2 stays resident
        ],
        out_specs=pl.BlockSpec((tile_m, ap), lambda i: (i, 0)),
        compiler_params=pltpu.CompilerParams(
            dimension_semantics=("parallel",),  # shard batch across v7x's 2 TCs
            vmem_limit_bytes=4 << 20,           # live data ~200 KiB; keep small
        ),
    )(x_pad, w1t, w2t)
    return out[:b, :a]


@functools.partial(jax.jit, static_argnames=("a",))
def policy_forward(ht_list, pt, rt, w1t, w2t, *, a):
    """Single-state Policy.forward (the literal PyTorch hot path, batch 1).

    ht_list : list of entity-embedding arrays (stacked + flattened, like
              torch.stack(Ht).view(-1))
    pt      : last LSTM hidden state for the current path (flattened)
    rt      : relation features (flattened)
    returns : (a,) f32 action logits
    """
    # Concatenate inside the same jit as the pallas_call so XLA fuses it.
    ht_flat = jnp.stack(ht_list).reshape(-1)
    x = jnp.concatenate([ht_flat, pt.reshape(-1), rt.reshape(-1)], axis=-1)  # (D,)
    return policy_forward_batch(x[None, :], w1t, w2t, a=a)[0]


if __name__ == "__main__":
    # Small, self-consistent hyperparameters (mirroring Policy.__init__):
    emb_dim = 16
    hidden_dim = 32
    num_subgraph = 2
    num_entity = 8
    num_rel = 4
    lstm_num_layers = 1
    batch_size = 1

    # Ht: two entity embeddings; Rt: one relation embedding.
    # input_dim = len(Ht_flat) + len(Rt_flat) = 2*emb_dim + emb_dim = 48
    input_dim = 2 * emb_dim + emb_dim
    D = input_dim + hidden_dim                        # fc1 in/out features = 80
    action_dim = num_subgraph * num_entity * num_rel  # fc2 out features = 64

    key = jax.random.PRNGKey(0)
    k_ht0, k_ht1, k_rt, k_pt, k_w1, k_w2, k_batch = jax.random.split(key, 7)

    # Deterministic "state" inputs for the single-step (batch_size=1) path.
    Ht = [
        jax.random.normal(k_ht0, (emb_dim,), dtype=jnp.float32),
        jax.random.normal(k_ht1, (emb_dim,), dtype=jnp.float32),
    ]
    Rt = jax.random.normal(k_rt, (emb_dim,), dtype=jnp.float32)
    # pt = self.path[-1][0][-1, :, :]  -> (batch_size, hidden_dim) LSTM hidden
    pt = jax.random.normal(k_pt, (batch_size, hidden_dim), dtype=jnp.float32)

    # Deterministic parameters (PyTorch Linear convention: (out, in)).
    w_fc1 = jax.random.normal(k_w1, (D, D), dtype=jnp.float32) * 0.05
    w_fc2 = jax.random.normal(k_w2, (action_dim, D), dtype=jnp.float32) * 0.05

    # One-time parameter prep (hoisted out of the per-step hot path).
    w1t_p, w2t_p, d, a = prepare_policy_params(w_fc1, w_fc2)

    # TODO(synk): init_path/update_path/encode (nn.LSTM rollout + one-hot
    # bookkeeping) are stateful helpers outside forward(); only forward() is
    # implemented here.

    # --- 1) Single-state forward (exact PyTorch forward semantics) ---------
    logits = policy_forward(Ht, pt, Rt, w1t_p, w2t_p, a=a)
    jax.block_until_ready(logits)

    x_ref1 = jnp.concatenate(
        [jnp.stack(Ht).reshape(-1), pt.reshape(-1), Rt.reshape(-1)]
    )
    ref1 = jnp.maximum(x_ref1 @ w_fc1.T, 0.0) @ w_fc2.T
    assert logits.shape == (action_dim,)
    assert jnp.allclose(logits, ref1, atol=2e-2, rtol=2e-2), (
        f"max abs err {jnp.max(jnp.abs(logits - ref1))}"
    )

    # --- 2) Batched forward (amortizes dispatch / weight DMA over M) -------
    # Exercises the M grid (200 rows -> pad 256 -> 2 tiles of 128) and padding.
    B = 200
    x_batch = jax.random.normal(k_batch, (B, D), dtype=jnp.float32)
    logits_b = policy_forward_batch(x_batch, w1t_p, w2t_p, a=a)
    jax.block_until_ready(logits_b)

    ref_b = jnp.maximum(x_batch @ w_fc1.T, 0.0) @ w_fc2.T
    assert logits_b.shape == (B, action_dim)
    assert jnp.allclose(logits_b, ref_b, atol=2e-2, rtol=2e-2), (
        f"max abs err {jnp.max(jnp.abs(logits_b - ref_b))}"
    )

    print("KERNEL_OK")
</pallas_src>

<mosaic_0001>
module attributes {stable_mosaic.version = 11 : i64} {
  func.func @_policy_kernel(%arg0: i32, %arg1: memref<16x128xbf16, #tpu.memory_space<vmem>>, %arg2: memref<128x128xbf16, #tpu.memory_space<vmem>>, %arg3: memref<128x128xbf16, #tpu.memory_space<vmem>>, %arg4: memref<16x128xf32, #tpu.memory_space<vmem>>) attributes {dimension_semantics = [#tpu.dimension_semantics<parallel>], iteration_bounds = array<i64: 1>, scalar_prefetch = 0 : i64, scratch_operands = 0 : i64, tpu.core_type = #tpu.core_type<tc>, window_params = [{transform_indices = @transform_0, window_bounds = array<i64: 16, 128>}, {pipeline_mode = #tpu.pipeline_mode<synchronous>, transform_indices = @transform_1, window_bounds = array<i64: 128, 128>}, {pipeline_mode = #tpu.pipeline_mode<synchronous>, transform_indices = @transform_2, window_bounds = array<i64: 128, 128>}, {transform_indices = @transform_3, window_bounds = array<i64: 16, 128>}]} {
    %c0 = arith.constant 0 : index
    %c0_0 = arith.constant 0 : index
    %0 = vector.load %arg1[%c0, %c0_0] : memref<16x128xbf16, #tpu.memory_space<vmem>>, vector<16x128xbf16>
    %c0_1 = arith.constant 0 : index
    %c0_2 = arith.constant 0 : index
    %1 = vector.load %arg2[%c0_1, %c0_2] : memref<128x128xbf16, #tpu.memory_space<vmem>>, vector<128x128xbf16>
    %cst = arith.constant dense<0.000000e+00> : vector<16x128xf32>
    %2 = tpu.matmul %0, %1, %cst {dimension_numbers = #tpu.dot_dimension_numbers<[1], [0], [0], [1], [0, 0, 1, 1], [], []>} : vector<16x128xbf16>, vector<128x128xbf16>, vector<16x128xf32> -> vector<16x128xf32>
    %cst_3 = arith.constant 0.000000e+00 : f32
    %3 = vector.broadcast %cst_3 : f32 to vector<16x128xf32>
    %4 = arith.maximumf %2, %3 : vector<16x128xf32>
    %5 = arith.truncf %4 : vector<16x128xf32> to vector<16x128xbf16>
    %c0_4 = arith.constant 0 : index
    %c0_5 = arith.constant 0 : index
    %6 = vector.load %arg3[%c0_4, %c0_5] : memref<128x128xbf16, #tpu.memory_space<vmem>>, vector<128x128xbf16>
    %cst_6 = arith.constant dense<0.000000e+00> : vector<16x128xf32>
    %7 = tpu.matmul %5, %6, %cst_6 {dimension_numbers = #tpu.dot_dimension_numbers<[1], [0], [0], [1], [0, 0, 1, 1], [], []>} : vector<16x128xbf16>, vector<128x128xbf16>, vector<16x128xf32> -> vector<16x128xf32>
    %c0_7 = arith.constant 0 : index
    %c0_8 = arith.constant 0 : index
    %8 = vector.load %arg4[%c0_7, %c0_8] : memref<16x128xf32, #tpu.memory_space<vmem>>, vector<16x128xf32>
    tpu.vector_store %arg4[%c0_7, %c0_8], %7 {strides = array<i32>} : memref<16x128xf32, #tpu.memory_space<vmem>>, vector<16x128xf32>,
    return
  }
  func.func @transform_0(%arg0: i32) -> (i32, i32) {
    %c0_i32 = arith.constant 0 : i32
    %c0_i32_0 = arith.constant 0 : i32
    return %arg0, %c0_i32 : i32, i32
  }
  func.func @transform_1(%arg0: i32) -> (i32, i32) {
    %c0_i32 = arith.constant 0 : i32
    %c0_i32_0 = arith.constant 0 : i32
    %c0_i32_1 = arith.constant 0 : i32
    return %c0_i32, %c0_i32_0 : i32, i32
  }
  func.func @transform_2(%arg0: i32) -> (i32, i32) {
    %c0_i32 = arith.constant 0 : i32
    %c0_i32_0 = arith.constant 0 : i32
    %c0_i32_1 = arith.constant 0 : i32
    return %c0_i32, %c0_i32_0 : i32, i32
  }
  func.func @transform_3(%arg0: i32) -> (i32, i32) {
    %c0_i32 = arith.constant 0 : i32
    %c0_i32_0 = arith.constant 0 : i32
    return %arg0, %c0_i32 : i32, i32
  }
}

</mosaic_0001>

<llo_original>
// kernel: policy_forward_batch.1
$region0: #{policy_forward_batch.1}
  #allocation0 [shape = 'u32[]', space=smem, size = 0x4, offset = 0x4, fixed_abs, tag = 'smem constant byte address 0x4 - core index']
  #allocation1 [shape = 'u32[144,128]{1,0:T(1,128)}', space=vmem, size = 0x12000, scoped, tag = 'internal scratch']
  %s0 = inlined_call_operand.vmem [shape: bf16[16,128], index: 0, kind: input, shape index: {}]
  %s1 = inlined_call_operand.hbm [shape: bf16[128,128], index: 1, kind: input, shape index: {}]
  %s2 = inlined_call_operand.hbm [shape: bf16[128,128], index: 2, kind: input, shape index: {}]
  %s3 = inlined_call_operand.vmem [shape: f32[16,128], index: 3, kind: output, shape index: {}]
  %s4 = sld [smem:[#allocation0]]
  $region30: #{policy_forward_batch.1} parent=0
    _
  %s6 = ssub.s32 1, %s4
  %s7 = scalar_select 0, %s6, %s4
  $region1: #{policy_forward_batch.1} parent=0
    #allocation2 [shape = 'u8[32768]{0}', space=vmem, size = 0x8000, scoped, tag = 'input window, operand 1, single buffered']
    #allocation3 [shape = 's32[1]{0}', space=sflag, size = 0x4, scoped, tag = 'scoped memory for policy_forward_batch.1']
    #allocation4 [shape = 'u8[32768]{0}', space=vmem, size = 0x8000, scoped, tag = 'input window, operand 2, single buffered']
    #allocation5 [shape = 's32[1]{0}', space=sflag, size = 0x4, scoped, tag = 'scoped memory for policy_forward_batch.1']
    %8 = vsyncpa [#allocation3], 0
    %9 = vsyncpa [#allocation5], 0
    // Predicated region
    $region2: #{policy_forward_batch.1} parent=1 // pred_check
      _
    $region3: #{policy_forward_batch.1} parent=1 // pred_check_branch
      %11 = sbr.rel (0) target = $region5
    $region4: #{policy_forward_batch.1} parent=1 // pred_region
      _
    $region5: #{policy_forward_batch.1} parent=1 // pred_fallthru
      _
    // Predicated region
    $region6: #{policy_forward_batch.1} parent=1 // pred_check
      _
    $region7: #{policy_forward_batch.1} parent=1 // pred_check_branch
      %13 = sbr.rel (0) target = $region9
    $region8: #{policy_forward_batch.1} parent=1 // pred_region
      %s15 = ssub.s32 1024, 1024
      %16 = vsyncadd [#allocation3], %s15
      %s17 = sshll.u32 [#allocation2], 4
      %s18 = int_to_ptr.vmem [resolvable:$true] %s17
      %23 = dma.hbm_to_vmem [thread:$0]  %s1, 1024, %s18, [#allocation3], 64, 64, 4
    $region9: #{policy_forward_batch.1} parent=1 // pred_fallthru
      _
    // Predicated region
    $region10: #{policy_forward_batch.1} parent=1 // pred_check
      _
    $region11: #{policy_forward_batch.1} parent=1 // pred_check_branch
      %25 = sbr.rel (0) target = $region13
    $region12: #{policy_forward_batch.1} parent=1 // pred_region
      %s27 = ssub.s32 1024, 1024
      %28 = vsyncadd [#allocation5], %s27
      %s29 = sshll.u32 [#allocation4], 4
      %s30 = int_to_ptr.vmem [resolvable:$true] %s29
      %35 = dma.hbm_to_vmem [thread:$0]  %s2, 1024, %s30, [#allocation5], 64, 64, 4
    $region13: #{policy_forward_batch.1} parent=1 // pred_fallthru
      _
    // Predicated region
    $region14: #{policy_forward_batch.1} parent=1 // pred_check
      _
    $region15: #{policy_forward_batch.1} parent=1 // pred_check_branch
      %37 = sbr.rel (0) target = $region17
    $region16: #{policy_forward_batch.1} parent=1 // pred_region
      %38 = dma.done [#allocation3], 1024
    $region17: #{policy_forward_batch.1} parent=1 // pred_fallthru
      _
    // Predicated region
    $region18: #{policy_forward_batch.1} parent=1 // pred_check
      _
    $region19: #{policy_forward_batch.1} parent=1 // pred_check_branch
      %40 = sbr.rel (0) target = $region21
    $region20: #{policy_forward_batch.1} parent=1 // pred_region
      %41 = dma.done [#allocation5], 1024
    $region21: #{policy_forward_batch.1} parent=1 // pred_fallthru
      _
    %v43 = vld [vmem:[%s0] sm:$0xf]
    %v44 = vld [vmem:[%s0 + $0x4] sm:$0xf]
    %v45 = vld [vmem:[#allocation2] sm:$0xf]
    %v46 = vld [vmem:[#allocation2 + $0x4] sm:$0xf]
    %v47 = vld [vmem:[#allocation2 + $0x8] sm:$0xf]
    %v48 = vld [vmem:[#allocation2 + $0xc] sm:$0xf]
    %v49 = vld [vmem:[#allocation2 + $0x10] sm:$0xf]
    %v50 = vld [vmem:[#allocation2 + $0x14] sm:$0xf]
    %v51 = vld [vmem:[#allocation2 + $0x18] sm:$0xf]
    %v52 = vld [vmem:[#allocation2 + $0x1c] sm:$0xf]
    %v53 = vld [vmem:[#allocation2 + $0x20] sm:$0xf]
    %v54 = vld [vmem:[#allocation2 + $0x24] sm:$0xf]
    %v55 = vld [vmem:[#allocation2 + $0x28] sm:$0xf]
    %v56 = vld [vmem:[#allocation2 + $0x2c] sm:$0xf]
    %v57 = vld [vmem:[#allocation2 + $0x30] sm:$0xf]
    %v58 = vld [vmem:[#allocation2 + $0x34] sm:$0xf]
    %v59 = vld [vmem:[#allocation2 + $0x38] sm:$0xf]
    %v60 = vld [vmem:[#allocation2 + $0x3c] sm:$0xf]
    %v63 = vunpack.c.l.b16 %v43
    %v64 = vunpack.c.l.b16 %v44
    %v65 = vpack.c.b16 %v64, %v63
    %v83 = vunpack.c.l.b16 %v45
    %v84 = vunpack.c.l.b16 %v46
    %v85 = vunpack.c.l.b16 %v47
    %v86 = vunpack.c.l.b16 %v48
    %v87 = vunpack.c.l.b16 %v49
    %v88 = vunpack.c.l.b16 %v50
    %v89 = vunpack.c.l.b16 %v51
    %v90 = vunpack.c.l.b16 %v52
    %v91 = vunpack.c.l.b16 %v53
    %v92 = vunpack.c.l.b16 %v54
    %v93 = vunpack.c.l.b16 %v55
    %v94 = vunpack.c.l.b16 %v56
    %v95 = vunpack.c.l.b16 %v57
    %v96 = vunpack.c.l.b16 %v58
    %v97 = vunpack.c.l.b16 %v59
    %v98 = vunpack.c.l.b16 %v60
    %v99 = vpack.c.b16 %v84, %v83
    %v100 = vpack.c.b16 %v86, %v85
    %v101 = vpack.c.b16 %v88, %v87
    %v102 = vpack.c.b16 %v90, %v89
    %v103 = vpack.c.b16 %v92, %v91
    %v104 = vpack.c.b16 %v94, %v93
    %v105 = vpack.c.b16 %v96, %v95
    %v106 = vpack.c.b16 %v98, %v97
    %115 = vmatprep.subr.bf16.mxu0 0
    %116 = vmatpush1.bf16.msra.mxu0 %v99
    %117 = vmatprep.subr.bf16.mxu0 0
    %118 = vmatpush1.bf16.msra.mxu0 %v100
    %119 = vmatprep.subr.bf16.mxu0 0
    %120 = vmatpush1.bf16.msra.mxu0 %v101
    %121 = vmatprep.subr.bf16.mxu0 0
    %122 = vmatpush1.bf16.msra.mxu0 %v102
    %123 = vmatprep.subr.bf16.mxu0 0
    %124 = vmatpush1.bf16.msra.mxu0 %v103
    %125 = vmatprep.subr.bf16.mxu0 0
    %126 = vmatpush1.bf16.msra.mxu0 %v104
    %127 = vmatprep.subr.bf16.mxu0 0
    %128 = vmatpush1.bf16.msra.mxu0 %v105
    %129 = vmatprep.subr.bf16.mxu0 0
    %130 = vmatpush1.bf16.msra.mxu0 %v106
    %131 = vmatprep.subr.bf16.mxu0 0
    %132 = vmatpush1.bf16.msra.mxu0 0
    %133 = vmatprep.subr.bf16.mxu0 0
    %134 = vmatpush1.bf16.msra.mxu0 0
    %135 = vmatprep.subr.bf16.mxu0 0
    %136 = vmatpush1.bf16.msra.mxu0 0
    %137 = vmatprep.subr.bf16.mxu0 0
    %138 = vmatpush1.bf16.msra.mxu0 0
    %139 = vmatprep.subr.bf16.mxu0 0
    %140 = vmatpush1.bf16.msra.mxu0 0
    %141 = vmatprep.subr.bf16.mxu0 0
    %142 = vmatpush1.bf16.msra.mxu0 0
    %143 = vmatprep.subr.bf16.mxu0 0
    %144 = vmatpush1.bf16.msra.mxu0 0
    %145 = vmatprep.subr.bf16.mxu0 0
    %146 = vmatpush1.bf16.msra.mxu0 0
    %147 = vmatprep.mubr.bf16.mxu0 0
    %148 = vmatmul.mubr.bf16.gmra.mrb[0].mxu0 %v65
    %v149 = vpop.f32.mrb[0].mxu0
    %v150 = vadd.f32 0.0, %v149
    %v151 = vpop.f32.mrb[0].mxu0
    %v152 = vpop.f32.mrb[0].mxu0
    %v153 = vadd.f32 0.0, %v152
    %v154 = vpop.f32.mrb[0].mxu0
    %155 = vdwg.mxu0
    %v156 = vmax.f32 %v150, 0.0
    %v157 = vmax.f32 %v153, 0.0
    %v158 = vpack.c.bf16 %v157, %v156
    %v159 = vld [vmem:[#allocation4] sm:$0xf]
    %v160 = vld [vmem:[#allocation4 + $0x4] sm:$0xf]
    %v161 = vld [vmem:[#allocation4 + $0x8] sm:$0xf]
    %v162 = vld [vmem:[#allocation4 + $0xc] sm:$0xf]
    %v163 = vld [vmem:[#allocation4 + $0x10] sm:$0xf]
    %v164 = vld [vmem:[#allocation4 + $0x14] sm:$0xf]
    %v165 = vld [vmem:[#allocation4 + $0x18] sm:$0xf]
    %v166 = vld [vmem:[#allocation4 + $0x1c] sm:$0xf]
    %v167 = vld [vmem:[#allocation4 + $0x20] sm:$0xf]
    %v168 = vld [vmem:[#allocation4 + $0x24] sm:$0xf]
    %v169 = vld [vmem:[#allocation4 + $0x28] sm:$0xf]
    %v170 = vld [vmem:[#allocation4 + $0x2c] sm:$0xf]
    %v171 = vld [vmem:[#allocation4 + $0x30] sm:$0xf]
    %v172 = vld [vmem:[#allocation4 + $0x34] sm:$0xf]
    %v173 = vld [vmem:[#allocation4 + $0x38] sm:$0xf]
    %v174 = vld [vmem:[#allocation4 + $0x3c] sm:$0xf]
    %v191 = vunpack.c.l.b16 %v159
    %v192 = vunpack.c.l.b16 %v160
    %v193 = vunpack.c.l.b16 %v161
    %v194 = vunpack.c.l.b16 %v162
    %v195 = vunpack.c.l.b16 %v163
    %v196 = vunpack.c.l.b16 %v164
    %v197 = vunpack.c.l.b16 %v165
    %v198 = vunpack.c.l.b16 %v166
    %v199 = vunpack.c.l.b16 %v167
    %v200 = vunpack.c.l.b16 %v168
    %v201 = vunpack.c.l.b16 %v169
    %v202 = vunpack.c.l.b16 %v170
    %v203 = vunpack.c.l.b16 %v171
    %v204 = vunpack.c.l.b16 %v172
    %v205 = vunpack.c.l.b16 %v173
    %v206 = vunpack.c.l.b16 %v174
    %v207 = vpack.c.b16 %v192, %v191
    %v208 = vpack.c.b16 %v194, %v193
    %v209 = vpack.c.b16 %v196, %v195
    %v210 = vpack.c.b16 %v198, %v197
    %v211 = vpack.c.b16 %v200, %v199
    %v212 = vpack.c.b16 %v202, %v201
    %v213 = vpack.c.b16 %v204, %v203
    %v214 = vpack.c.b16 %v206, %v205
    %223 = vmatprep.subr.bf16.mxu0 0
    %224 = vmatpush1.bf16.msra.mxu0 %v207
    %225 = vmatprep.subr.bf16.mxu0 0
    %226 = vmatpush1.bf16.msra.mxu0 %v208
    %227 = vmatprep.subr.bf16.mxu0 0
    %228 = vmatpush1.bf16.msra.mxu0 %v209
    %229 = vmatprep.subr.bf16.mxu0 0
    %230 = vmatpush1.bf16.msra.mxu0 %v210
    %231 = vmatprep.subr.bf16.mxu0 0
    %232 = vmatpush1.bf16.msra.mxu0 %v211
    %233 = vmatprep.subr.bf16.mxu0 0
    %234 = vmatpush1.bf16.msra.mxu0 %v212
    %235 = vmatprep.subr.bf16.mxu0 0
    %236 = vmatpush1.bf16.msra.mxu0 %v213
    %237 = vmatprep.subr.bf16.mxu0 0
    %238 = vmatpush1.bf16.msra.mxu0 %v214
    %239 = vmatprep.subr.bf16.mxu0 0
    %240 = vmatpush1.bf16.msra.mxu0 0
    %241 = vmatprep.subr.bf16.mxu0 0
    %242 = vmatpush1.bf16.msra.mxu0 0
    %243 = vmatprep.subr.bf16.mxu0 0
    %244 = vmatpush1.bf16.msra.mxu0 0
    %245 = vmatprep.subr.bf16.mxu0 0
    %246 = vmatpush1.bf16.msra.mxu0 0
    %247 = vmatprep.subr.bf16.mxu0 0
    %248 = vmatpush1.bf16.msra.mxu0 0
    %249 = vmatprep.subr.bf16.mxu0 0
    %250 = vmatpush1.bf16.msra.mxu0 0
    %251 = vmatprep.subr.bf16.mxu0 0
    %252 = vmatpush1.bf16.msra.mxu0 0
    %253 = vmatprep.subr.bf16.mxu0 0
    %254 = vmatpush1.bf16.msra.mxu0 0
    %255 = vmatprep.mubr.bf16.mxu0 0
    %256 = vmatmul.mubr.bf16.gmra.mrb[0].mxu0 %v158
    %v257 = vpop.f32.mrb[0].mxu0
    %v258 = vadd.f32 0.0, %v257
    %v259 = vpop.f32.mrb[0].mxu0
    %v260 = vpop.f32.mrb[0].mxu0
    %v261 = vadd.f32 0.0, %v260
    %v262 = vpop.f32.mrb[0].mxu0
    %263 = vdwg.mxu0
    %264 = vst [vmem:[%s3] sm:$0xff] %v258
    %265 = vst [vmem:[%s3 + $0x8] sm:$0xff] %v261
    // Predicated region
    $region22: #{policy_forward_batch.1} parent=1 // pred_check
      _
    $region23: #{policy_forward_batch.1} parent=1 // pred_check_branch
      %267 = sbr.rel (0) target = $region25
    $region24: #{policy_forward_batch.1} parent=1 // pred_region
      _
    $region25: #{policy_forward_batch.1} parent=1 // pred_fallthru
      _
    // Predicated region
    $region26: #{policy_forward_batch.1} parent=1 // pred_check
      _
    $region27: #{policy_forward_batch.1} parent=1 // pred_check_branch
      %269 = sbr.rel (0) target = $region29
    $region28: #{policy_forward_batch.1} parent=1 // pred_region
      _
    $region29: #{policy_forward_batch.1} parent=1 // pred_fallthru
      _
    %270 = vsyncpa [#allocation3], 1
    %271 = vsyncpa [#allocation5], 1

</llo_original>
